<compile_context>
chip_gen: v6e
topology: v6e:2x2x1
jax: 0.10.0
libtpu: 0.0.40
codegen_flags: <defaults>
</compile_context>

<pallas_src>
import jax
import jax.numpy as jnp
from jax.experimental import pallas as pl
from jax.experimental.pallas import tpu as pltpu


def _tile_payload(x_tile: jnp.ndarray) -> jnp.ndarray:
    """Per-tile elementwise regularization payload (identity for the ABC)."""
    return x_tile


def _strategic_reg_kernel(x_ref, o_ref):
    """Tiled reduction -> per-chunk (8, 128) partial sums.

    x_ref : (tile_rows, 128) VMEM tile of the flattened input (always full —
            the wrapper only feeds whole tiles, no masking needed).
    o_ref : (1, 8, 128) f32 VMEM per-chunk output block, resident across the
            sequential reduction axis; used directly as the accumulator.
    """
    i = pl.program_id(1)  # sequential reduction axis within a chunk

    @pl.when(i == 0)
    def _init():
        o_ref[...] = jnp.zeros_like(o_ref)

    tile_rows, feat = x_ref.shape
    contrib = _tile_payload(x_ref[...].astype(jnp.float32))

    # Fold the (tile_rows, 128) tile onto the (8, 128) accumulator: the
    # reshape groups whole (8, 128) vreg tiles (no relayout) and the axis-0
    # sum is a pure VPU vreg-add tree — cheap filler under the input DMA.
    o_ref[0] += contrib.reshape(tile_rows // 8, 8, feat).sum(axis=0)


def strategic_regularization_term(
    x: jnp.ndarray,
    *,
    tile_rows: int = 8192,
    num_chunks: int = 1,
) -> jnp.ndarray:
    """Compute the scalar strategic-regularization term of `x` with Pallas.

    Returns a scalar (shape ()) float32 array, matching the PyTorch contract.

    tile_rows  : rows per (rows, 128) input block.  Default 8192 (4 MiB f32,
                 8 MiB double-buffered — within every generation's scoped-VMEM
                 default).  Rounded to the dtype's sublane-packing multiple and
                 auto-shrunk for smaller inputs.
    num_chunks : optional leading "parallel" grid axis (per-chunk private
                 output block).  Default 1: on single-TC chips a chunk split
                 is pure overhead for a mem-bound kernel.
    """
    feat = 128
    flat = x.reshape(-1)
    n = flat.shape[0]

    if n == 0:
        return jnp.float32(0.0)

    itemsize = jnp.dtype(x.dtype).itemsize
    # Sublane-packing multiple: 8 for f32, 16 for bf16, 32 for int8/fp8.
    min_rows = max(8, 32 // max(1, itemsize))
    rows = n // feat  # complete 128-lane rows available

    # Tiny inputs: pallas_call launch costs more than the reduction itself.
    if rows < min_rows:
        return jnp.sum(flat.astype(jnp.float32))

    tile_rows = max(min_rows, (int(tile_rows) // min_rows) * min_rows)
    tile_rows = min(tile_rows, (rows // min_rows) * min_rows)
    tile_elems = tile_rows * feat

    tiles_total = n // tile_elems            # >= 1 by construction
    num_chunks = max(1, min(int(num_chunks), tiles_total))
    steps = tiles_total // num_chunks
    bulk = num_chunks * steps * tile_elems   # exact multiple of tile_elems

    # Contiguous prefix, reshaped into a lane-dense (rows, 128) view.
    # No padding, no slab copy: every block the kernel sees is full.
    slab = flat[:bulk].reshape(num_chunks * steps * tile_rows, feat)

    partials = pl.pallas_call(
        _strategic_reg_kernel,
        out_shape=jax.ShapeDtypeStruct((num_chunks, 8, feat), jnp.float32),
        grid_spec=pltpu.PrefetchScalarGridSpec(
            num_scalar_prefetch=0,
            grid=(num_chunks, steps),
            in_specs=[
                pl.BlockSpec(
                    (tile_rows, feat),
                    lambda c, i: (c * steps + i, 0),
                )
            ],
            out_specs=pl.BlockSpec((1, 8, feat), lambda c, i: (c, 0, 0)),
        ),
        compiler_params=pltpu.CompilerParams(
            dimension_semantics=("parallel", "arbitrary")
        ),
        cost_estimate=pl.CostEstimate(
            flops=bulk,
            transcendentals=0,
            bytes_accessed=bulk * itemsize + num_chunks * 8 * feat * 4,
        ),
    )(slab)

    total = jnp.sum(partials)

    # Sub-tile tail (fewer than num_chunks * tile_elems elements): plain JAX.
    if bulk < n:
        total = total + jnp.sum(flat[bulk:].astype(jnp.float32))
    return total


class _StrategicRegularization:
    """JAX/Pallas mirror of the abstract strategic_ml base class."""

    def __init__(self) -> None:
        # No parameters: the PyTorch __init__ registers nothing.
        pass

    def forward(self, *args, **kwargs) -> jnp.ndarray:
        raise NotImplementedError()

    def __call__(self, *args, **kwargs) -> jnp.ndarray:
        return self.forward(*args, **kwargs)


class _SumStrategicRegularization(_StrategicRegularization):
    """Minimal concrete subclass exercising the Pallas reduction kernel."""

    def forward(self, x_prime: jnp.ndarray) -> jnp.ndarray:
        return strategic_regularization_term(x_prime)


if __name__ == "__main__":
    key = jax.random.PRNGKey(0)
    k0, k1, k2 = jax.random.split(key, 3)

    # Abstract base class behaves exactly like the PyTorch one.
    base = _StrategicRegularization()
    try:
        base(jnp.zeros((2, 2), dtype=jnp.float32))
        raise AssertionError("abstract forward should have raised")
    except NotImplementedError:
        pass

    reg = _SumStrategicRegularization()

    # Tiny strategic-response batch (batch=8, hidden=32): fallback path.
    x_small = jax.random.normal(k0, (8, 32), dtype=jnp.float32)
    t_small = jax.block_until_ready(reg(x_small))
    assert t_small.shape == ()
    assert jnp.allclose(t_small, jnp.sum(x_small), rtol=1e-5, atol=1e-4)

    # Kernel path: batch=64, hidden=512 -> 256 lane-dense rows.
    x_mid = jax.random.normal(k1, (64, 512), dtype=jnp.float32)
    ref_mid = jnp.sum(x_mid)

    t_default = jax.block_until_ready(strategic_regularization_term(x_mid))
    assert t_default.shape == ()
    assert jnp.allclose(t_default, ref_mid, rtol=1e-4, atol=1e-2)

    # Exercise the multi-step accumulation + dual-chunk path with small tiles.
    t_multi = jax.block_until_ready(
        strategic_regularization_term(x_mid, tile_rows=32, num_chunks=2)
    )
    assert t_multi.shape == ()
    assert jnp.allclose(t_multi, ref_mid, rtol=1e-4, atol=1e-2)

    # Ragged input (not a multiple of 128): kernel bulk + plain-JAX tail.
    x_ragged = jax.random.normal(k2, (33, 130), dtype=jnp.float32)
    t_ragged = jax.block_until_ready(
        strategic_regularization_term(x_ragged, tile_rows=16)
    )
    assert t_ragged.shape == ()
    assert jnp.allclose(t_ragged, jnp.sum(x_ragged), rtol=1e-4, atol=1e-2)

    print("KERNEL_OK")
</pallas_src>

<mosaic_0001>
module attributes {stable_mosaic.version = 11 : i64} {
  func.func @_strategic_reg_kernel(%arg0: i32, %arg1: i32, %arg2: memref<256x128xf32, #tpu.memory_space<vmem>>, %arg3: memref<1x8x128xf32, #tpu.memory_space<vmem>>) attributes {dimension_semantics = [#tpu.dimension_semantics<parallel>, #tpu.dimension_semantics<arbitrary>], iteration_bounds = array<i64: 1, 1>, scalar_prefetch = 0 : i64, scratch_operands = 0 : i64, tpu.core_type = #tpu.core_type<tc>, window_params = [{transform_indices = @transform_0, window_bounds = array<i64: 256, 128>}, {transform_indices = @transform_1, window_bounds = array<i64: 1, 8, 128>}]} {
    %c0_i32 = arith.constant 0 : i32
    %0 = arith.cmpi eq, %arg1, %c0_i32 : i32
    %1 = arith.extui %0 : i1 to i32
    %c0_i32_0 = arith.constant 0 : i32
    %2 = arith.cmpi ne, %1, %c0_i32_0 : i32
    scf.if %2 {
      %cst_8 = arith.constant 0.000000e+00 : f32
      %12 = vector.broadcast %cst_8 : f32 to vector<1x8x128xf32>
      %c0_9 = arith.constant 0 : index
      %c0_10 = arith.constant 0 : index
      %c0_11 = arith.constant 0 : index
      %13 = vector.load %arg3[%c0_9, %c0_10, %c0_11] : memref<1x8x128xf32, #tpu.memory_space<vmem>>, vector<1x8x128xf32>
      tpu.vector_store %arg3[%c0_9, %c0_10, %c0_11], %12 {strides = array<i32>} : memref<1x8x128xf32, #tpu.memory_space<vmem>>, vector<1x8x128xf32>,
    } else {
    }
    %c0 = arith.constant 0 : index
    %c0_1 = arith.constant 0 : index
    %3 = vector.load %arg2[%c0, %c0_1] : memref<256x128xf32, #tpu.memory_space<vmem>>, vector<256x128xf32>
    %c0_2 = arith.constant 0 : index
    %c0_3 = arith.constant 0 : index
    %c0_4 = arith.constant 0 : index
    %4 = vector.load %arg3[%c0_2, %c0_3, %c0_4] : memref<1x8x128xf32, #tpu.memory_space<vmem>>, vector<1x8x128xf32>
    %5 = vector.shape_cast %4 : vector<1x8x128xf32> to vector<8x128xf32>
    %6 = vector.shape_cast %3 : vector<256x128xf32> to vector<32x8x128xf32>
    %cst = arith.constant dense<0.000000e+00> : vector<8x128xf32>
    %7 = vector.multi_reduction <add>, %6, %cst [0] : vector<32x8x128xf32> to vector<8x128xf32>
    %8 = arith.addf %5, %7 : vector<8x128xf32>
    %c0_5 = arith.constant 0 : index
    %c0_6 = arith.constant 0 : index
    %c0_7 = arith.constant 0 : index
    %9 = vector.load %arg3[%c0_5, %c0_6, %c0_7] : memref<1x8x128xf32, #tpu.memory_space<vmem>>, vector<1x8x128xf32>
    %10 = vector.shape_cast %9 : vector<1x8x128xf32> to vector<8x128xf32>
    %11 = vector.shape_cast %8 : vector<8x128xf32> to vector<1x8x128xf32>
    tpu.vector_store %arg3[%c0_5, %c0_6, %c0_7], %11 {strides = array<i32>} : memref<1x8x128xf32, #tpu.memory_space<vmem>>, vector<1x8x128xf32>,
    return
  }
  func.func @transform_0(%arg0: i32, %arg1: i32) -> (i32, i32) {
    %c1_i32 = arith.constant 1 : i32
    %0 = arith.muli %arg0, %c1_i32 : i32
    %1 = arith.addi %0, %arg1 : i32
    %c0_i32 = arith.constant 0 : i32
    %c0_i32_0 = arith.constant 0 : i32
    return %1, %c0_i32 : i32, i32
  }
  func.func @transform_1(%arg0: i32, %arg1: i32) -> (i32, i32, i32) {
    %c0_i32 = arith.constant 0 : i32
    %c0_i32_0 = arith.constant 0 : i32
    %c0_i32_1 = arith.constant 0 : i32
    return %arg0, %c0_i32, %c0_i32_0 : i32, i32, i32
  }
}

</mosaic_0001>

<llo_original>
// kernel: tpu_custom_call.1
$region0: #{tpu_custom_call.1}
  #allocation0 [shape = 'u32[]', space=smem, size = 0x4, offset = 0x4, fixed_abs, tag = 'smem constant byte address 0x4 - core index']
  #allocation1 [shape = 'u32[144,128]{1,0:T(1,128)}', space=vmem, size = 0x12000, scoped, tag = 'internal scratch']
  %s0 = inlined_call_operand.hbm [shape: f32[256,128], index: 0, kind: input, shape index: {}]
  %s1 = inlined_call_operand.hbm [shape: f32[1,8,128], index: 1, kind: output, shape index: {}]
  %s2 = sld [smem:[#allocation0]]
  $region22: #{tpu_custom_call.1} parent=0
    _
  %s4 = ssub.s32 1, %s2
  %s5 = scalar_select 0, %s4, %s2
  $region1: #{tpu_custom_call.1} parent=0
    #allocation2 [shape = 'u8[131072]{0}', space=vmem, size = 0x20000, scoped, tag = 'input window, operand 0, single buffered']
    #allocation3 [shape = 's32[1]{0}', space=sflag, size = 0x4, scoped, tag = 'scoped memory for tpu_custom_call.1']
    #allocation4 [shape = 's32[1]{0}', space=sflag, size = 0x4, scoped, tag = 'scoped memory for tpu_custom_call.1']
    #allocation5 [shape = 'u8[4096]{0}', space=vmem, size = 0x1000, scoped, tag = 'output window, operand 0, single buffered']
    %6 = vsyncpa [#allocation3], 0
    %7 = vsyncpa [#allocation4], 0
    // Predicated region
    $region2: #{tpu_custom_call.1} parent=1 // pred_check
      _
    $region3: #{tpu_custom_call.1} parent=1 // pred_check_branch
      %9 = sbr.rel (0) target = $region5
    $region4: #{tpu_custom_call.1} parent=1 // pred_region
      %s10 = sadd.s32 0, 0
      %s11 = smul.u32 32, %s10
      %s13 = ssub.s32 4096, 4096
      %14 = vsyncadd [#allocation3], %s13
      %s15 = smul.addr %s11, 128
      %s16 = scalar_lea.hbm %s0, %s15
      %s17 = sshll.u32 [#allocation2], 4
      %s18 = int_to_ptr.vmem [resolvable:$true] %s17
      %23 = dma.hbm_to_vmem [thread:$0]  %s16, 4096, %s18, [#allocation3], 128, 128, 8
    $region5: #{tpu_custom_call.1} parent=1 // pred_fallthru
      _
    // Predicated region
    $region6: #{tpu_custom_call.1} parent=1 // pred_check
      _
    $region7: #{tpu_custom_call.1} parent=1 // pred_check_branch
      %25 = sbr.rel (0) target = $region9
    $region8: #{tpu_custom_call.1} parent=1 // pred_region
      %26 = dma.done [#allocation3], 4096
    $region9: #{tpu_custom_call.1} parent=1 // pred_fallthru
      _
    %s27 = sadd.s32 0, 0
    %s28 = smul.u32 32, %s27
    %p29 = scmp.eq.s32.totalorder 0, 0
    // Predicated region
    $region10: #{tpu_custom_call.1} parent=1 // pred_check
      %p30 = pneg %p29
    $region11: #{tpu_custom_call.1} parent=1 // pred_check_branch
      %32 = sbr.rel (%p30) target = $region13
    $region12: #{tpu_custom_call.1} parent=1 // pred_region
      %33 = vst [vmem:[#allocation5] sm:$0xff] 0.0
    $region13: #{tpu_custom_call.1} parent=1 // pred_fallthru
      _
    %v34 = vld [vmem:[#allocation2] sm:$0xff]
    %v35 = vld [vmem:[#allocation2 + $0x8] sm:$0xff]
    %v36 = vld [vmem:[#allocation2 + $0x10] sm:$0xff]
    %v37 = vld [vmem:[#allocation2 + $0x18] sm:$0xff]
    %v38 = vld [vmem:[#allocation2 + $0x20] sm:$0xff]
    %v39 = vld [vmem:[#allocation2 + $0x28] sm:$0xff]
    %v40 = vld [vmem:[#allocation2 + $0x30] sm:$0xff]
    %v41 = vld [vmem:[#allocation2 + $0x38] sm:$0xff]
    %v42 = vld [vmem:[#allocation2 + $0x40] sm:$0xff]
    %v43 = vld [vmem:[#allocation2 + $0x48] sm:$0xff]
    %v44 = vld [vmem:[#allocation2 + $0x50] sm:$0xff]
    %v45 = vld [vmem:[#allocation2 + $0x58] sm:$0xff]
    %v46 = vld [vmem:[#allocation2 + $0x60] sm:$0xff]
    %v47 = vld [vmem:[#allocation2 + $0x68] sm:$0xff]
    %v48 = vld [vmem:[#allocation2 + $0x70] sm:$0xff]
    %v49 = vld [vmem:[#allocation2 + $0x78] sm:$0xff]
    %v50 = vld [vmem:[#allocation2 + $0x80] sm:$0xff]
    %v51 = vld [vmem:[#allocation2 + $0x88] sm:$0xff]
    %v52 = vld [vmem:[#allocation2 + $0x90] sm:$0xff]
    %v53 = vld [vmem:[#allocation2 + $0x98] sm:$0xff]
    %v54 = vld [vmem:[#allocation2 + $0xa0] sm:$0xff]
    %v55 = vld [vmem:[#allocation2 + $0xa8] sm:$0xff]
    %v56 = vld [vmem:[#allocation2 + $0xb0] sm:$0xff]
    %v57 = vld [vmem:[#allocation2 + $0xb8] sm:$0xff]
    %v58 = vld [vmem:[#allocation2 + $0xc0] sm:$0xff]
    %v59 = vld [vmem:[#allocation2 + $0xc8] sm:$0xff]
    %v60 = vld [vmem:[#allocation2 + $0xd0] sm:$0xff]
    %v61 = vld [vmem:[#allocation2 + $0xd8] sm:$0xff]
    %v62 = vld [vmem:[#allocation2 + $0xe0] sm:$0xff]
    %v63 = vld [vmem:[#allocation2 + $0xe8] sm:$0xff]
    %v64 = vld [vmem:[#allocation2 + $0xf0] sm:$0xff]
    %v65 = vld [vmem:[#allocation2 + $0xf8] sm:$0xff]
    %v66 = vld [vmem:[#allocation5] sm:$0xff]
    %v67 = vadd.f32 %v34, %v35
    %v68 = vadd.f32 %v67, %v36
    %v69 = vadd.f32 %v68, %v37
    %v70 = vadd.f32 %v69, %v38
    %v71 = vadd.f32 %v70, %v39
    %v72 = vadd.f32 %v71, %v40
    %v73 = vadd.f32 %v72, %v41
    %v74 = vadd.f32 %v73, %v42
    %v75 = vadd.f32 %v74, %v43
    %v76 = vadd.f32 %v75, %v44
    %v77 = vadd.f32 %v76, %v45
    %v78 = vadd.f32 %v77, %v46
    %v79 = vadd.f32 %v78, %v47
    %v80 = vadd.f32 %v79, %v48
    %v81 = vadd.f32 %v80, %v49
    %v82 = vadd.f32 %v81, %v50
    %v83 = vadd.f32 %v82, %v51
    %v84 = vadd.f32 %v83, %v52
    %v85 = vadd.f32 %v84, %v53
    %v86 = vadd.f32 %v85, %v54
    %v87 = vadd.f32 %v86, %v55
    %v88 = vadd.f32 %v87, %v56
    %v89 = vadd.f32 %v88, %v57
    %v90 = vadd.f32 %v89, %v58
    %v91 = vadd.f32 %v90, %v59
    %v92 = vadd.f32 %v91, %v60
    %v93 = vadd.f32 %v92, %v61
    %v94 = vadd.f32 %v93, %v62
    %v95 = vadd.f32 %v94, %v63
    %v96 = vadd.f32 %v95, %v64
    %v97 = vadd.f32 %v96, %v65
    %v98 = vadd.f32 %v66, %v97
    %99 = vst [vmem:[#allocation5] sm:$0xff] %v98
    // Predicated region
    $region14: #{tpu_custom_call.1} parent=1 // pred_check
      _
    $region15: #{tpu_custom_call.1} parent=1 // pred_check_branch
      %101 = sbr.rel (0) target = $region17
    $region16: #{tpu_custom_call.1} parent=1 // pred_region
      %s103 = ssub.s32 128, 128
      %104 = vsyncadd [#allocation4], %s103
      %s106 = sshll.u32 [#allocation5], 4
      %s107 = int_to_ptr.vmem [resolvable:$true] %s106
      %109 = dma.vmem_to_hbm [thread:$0]  %s107, 128, %s1, [#allocation4]
    $region17: #{tpu_custom_call.1} parent=1 // pred_fallthru
      _
    // Predicated region
    $region18: #{tpu_custom_call.1} parent=1 // pred_check
      _
    $region19: #{tpu_custom_call.1} parent=1 // pred_check_branch
      %111 = sbr.rel (0) target = $region21
    $region20: #{tpu_custom_call.1} parent=1 // pred_region
      %112 = dma.done [#allocation4], 128
    $region21: #{tpu_custom_call.1} parent=1 // pred_fallthru
      _
    %113 = vsyncpa [#allocation3], 1
    %114 = vsyncpa [#allocation4], 1

</llo_original>
